<compile_context>
chip_gen: v7x
topology: tpu7x:2x2x1
jax: 0.10.0
libtpu: 0.0.40
codegen_flags: <defaults>
</compile_context>

<pallas_src>
import jax
import jax.numpy as jnp
from jax.experimental import pallas as pl
from jax.experimental.pallas import tpu as pltpu


def _round_up(a, b):
    return (a + b - 1) // b * b


def _vmem_budget_bytes():
    """Per-generation VMEM budget: 3/4 of capacity, clamped to [32, 100] MiB."""
    cap = 64 * 1024 * 1024  # conservative default (v7x per-TC VMEM)
    try:
        cap = int(getattr(pltpu.get_tpu_info(), "vmem_capacity_bytes", cap))
    except Exception:
        pass
    return int(max(min(cap * 3 // 4, 100 * 1024 * 1024), 32 * 1024 * 1024))


def _maybe_buffered_spec(block_shape, index_map, buffers):
    """BlockSpec with pipeline_mode=pl.Buffered(buffers) when supported."""
    buffered_cls = getattr(pl, "Buffered", None)
    if buffers is not None and buffered_cls is not None:
        try:
            return pl.BlockSpec(block_shape, index_map,
                                pipeline_mode=buffered_cls(buffers))
        except TypeError:
            pass
    return pl.BlockSpec(block_shape, index_map)


# ----------------------------------------------------------------------------
# Stage 1: ResBlock chain   x <- x + SiLU(x @ W_l^T + b_l),  l = 0..L-1
# Grid = (token tiles, layers, output-column tiles of the layer).
# ----------------------------------------------------------------------------
def _make_chain_kernel(num_layers, num_n, tn):
    def kernel(x_ref, w_ref, b_ref, xr_ref, acc_ref, h_ref):
        l = pl.program_id(1)
        n = pl.program_id(2)

        # New token tile: seed the f32 residual accumulator from the input.
        @pl.when(jnp.logical_and(l == 0, n == 0))
        def _init():
            acc_ref[...] = x_ref[...].astype(jnp.float32)

        # Partial pre-activation for output columns [n*tn, (n+1)*tn):
        #   h = x @ W_l[n_block, :]^T + b_l[n_block]   (f32 accumulation)
        xw = acc_ref[...].astype(w_ref.dtype)           # cast only at MXU input
        h = jax.lax.dot_general(xw, w_ref[...], (((1,), (1,)), ((), ())),
                                preferred_element_type=jnp.float32)
        h_ref[n] = h + b_ref[...].astype(jnp.float32)

        # All columns of layer l computed -> residual + SiLU in f32.
        @pl.when(n == num_n - 1)
        def _apply():
            for nn in range(num_n):                     # static unrolled loop
                hh = h_ref[nn]
                acc_ref[:, nn * tn:(nn + 1) * tn] = (
                    acc_ref[:, nn * tn:(nn + 1) * tn] + hh * jax.lax.logistic(hh))

        # Last layer: emit x_res for this token tile.
        @pl.when(jnp.logical_and(l == num_layers - 1, n == num_n - 1))
        def _write():
            xr_ref[...] = acc_ref[...].astype(xr_ref.dtype)

    return kernel


def _resblock_chain(x_pad, w_stack, b_stack, *, tm, tn, vmem_limit):
    M_pad, H = x_pad.shape
    L = w_stack.shape[0]
    num_n = H // tn
    grid = (M_pad // tm, L, num_n)

    n_tok_tiles = grid[0]
    cost = pl.CostEstimate(
        flops=2 * M_pad * H * H * L,
        transcendentals=M_pad * H * L,
        bytes_accessed=int(
            2 * M_pad * H * x_pad.dtype.itemsize
            + n_tok_tiles * (w_stack.size * w_stack.dtype.itemsize
                             + b_stack.size * b_stack.dtype.itemsize)),
    )

    kernel = _make_chain_kernel(L, num_n, tn)
    return pl.pallas_call(
        kernel,
        out_shape=jax.ShapeDtypeStruct((M_pad, H), x_pad.dtype),
        grid_spec=pltpu.PrefetchScalarGridSpec(
            num_scalar_prefetch=0,
            grid=grid,
            in_specs=[
                pl.BlockSpec((tm, H), lambda i, l, n: (i, 0)),
                pl.BlockSpec((None, tn, H), lambda i, l, n: (l, n, 0)),
                pl.BlockSpec((None, 1, tn), lambda i, l, n: (l, 0, n)),
            ],
            out_specs=pl.BlockSpec((tm, H), lambda i, l, n: (i, 0)),
            scratch_shapes=[pltpu.VMEM((tm, H), jnp.float32),        # residual acc
                            pltpu.VMEM((num_n, tm, tn), jnp.float32)],  # h staging
        ),
        compiler_params=pltpu.CompilerParams(
            dimension_semantics=("parallel", "arbitrary", "arbitrary"),
            vmem_limit_bytes=int(vmem_limit),
        ),
        cost_estimate=cost,
    )(x_pad, w_stack, b_stack)


# ----------------------------------------------------------------------------
# Stage 2: vocab-streamed projection   y = x_res @ W_out^T
# Grid = (vocab tiles OUTER, token tiles inner) -> each W_out tile DMA'd once.
# ----------------------------------------------------------------------------
def _projection_kernel(x_ref, w_ref, o_ref):
    # "NT" contraction; W_out stays in torch (out, in) layout.
    # TODO(synk): if MLIR shows a per-step vxpose of the (tv, H) tile stealing
    # MXU issue slots, pre-transpose W_out to [H, V] once and switch to NN.
    y = jax.lax.dot_general(x_ref[...], w_ref[...], (((1,), (1,)), ((), ())),
                            preferred_element_type=jnp.float32)
    o_ref[...] = y.astype(o_ref.dtype)


def _projection(x_res, w_out_pad, *, tm, tv, out_dtype, vmem_limit, wout_buffers):
    M_pad, H = x_res.shape
    V_pad = w_out_pad.shape[0]
    grid = (V_pad // tv, M_pad // tm)

    n_x_passes = 1 if grid[1] == 1 else grid[0]
    cost = pl.CostEstimate(
        flops=2 * M_pad * H * V_pad,
        transcendentals=0,
        bytes_accessed=int(n_x_passes * M_pad * H * x_res.dtype.itemsize
                           + V_pad * H * w_out_pad.dtype.itemsize
                           + M_pad * V_pad * jnp.dtype(out_dtype).itemsize),
    )

    wout_spec = _maybe_buffered_spec((tv, H), lambda j, i: (j, 0), wout_buffers)

    return pl.pallas_call(
        _projection_kernel,
        out_shape=jax.ShapeDtypeStruct((M_pad, V_pad), out_dtype),
        grid_spec=pltpu.PrefetchScalarGridSpec(
            num_scalar_prefetch=0,
            grid=grid,
            in_specs=[pl.BlockSpec((tm, H), lambda j, i: (i, 0)), wout_spec],
            out_specs=pl.BlockSpec((tm, tv), lambda j, i: (i, j)),
        ),
        compiler_params=pltpu.CompilerParams(
            # Pure map, no scratch dependence: both axes megacore-shardable.
            dimension_semantics=("parallel", "parallel"),
            vmem_limit_bytes=int(vmem_limit),
        ),
        cost_estimate=cost,
    )(x_res, w_out_pad)


# ----------------------------------------------------------------------------
# Public wrapper
# ----------------------------------------------------------------------------
def medusa_head_pallas(x, block_weights, block_biases, out_weight, *,
                       out_dtype=jnp.float32):
    """MedusaHead forward pass (ResBlock chain + vocab projection).

    Args:
      x:             [M, H] activations (M = batch*seq flattened).
      block_weights: list of L arrays, each [H, H] in torch (out, in) layout.
      block_biases:  list of L arrays, each [H].
      out_weight:    [V, H] in torch (out, in) layout (no bias).
    Returns:
      [M, V] logits in `out_dtype`.
    """
    M, H = x.shape
    V, H2 = out_weight.shape
    assert H2 == H
    L = len(block_weights)

    budget = _vmem_budget_bytes()
    xb = x.dtype.itemsize
    pw = out_weight.dtype.itemsize
    rb = block_weights[0].dtype.itemsize if L else xb
    ob = jnp.dtype(out_dtype).itemsize
    # Sublane packing: f32 -> 8 rows/vreg, bf16 -> 16, int8 -> 32.
    mult = max(8, 32 // xb)

    # ---- token tiling (shared padded M) ------------------------------------
    tm_chain = _round_up(min(512, _round_up(M, mult)), mult)
    while tm_chain > mult and (4 * tm_chain * H * xb + 2 * tm_chain * H * 4) > budget * 6 // 10:
        tm_chain = max(mult, _round_up(tm_chain // 2, mult))
    M_pad = _round_up(M, tm_chain)

    def proj_need(tm, tv):
        return 2 * tm * H * xb + 3 * tv * H * pw + 2 * tm * tv * ob

    # A single resident token slab lets both W_out and x_res stream exactly once
    # (decode / small prefill); otherwise fall back to tm_chain-row tiles.
    if M_pad <= 4096 and proj_need(M_pad, 128) <= budget:
        tm_proj = M_pad
    else:
        tm_proj = tm_chain
        # TODO(synk): for very large prefill, a schedule holding x_res in a VMEM
        # scratch across the whole grid would avoid re-streaming it per W_out tile.

    # ---- vocab tiling (pad V to a lane-dense multiple of 128) --------------
    V_pad = _round_up(V, 128)
    tv = 128
    for cand in range(128, min(V_pad, 2048) + 1, 128):
        if V_pad % cand == 0 and proj_need(tm_proj, cand) <= budget:
            tv = cand

    # ---- ResBlock weight streaming tile (over the layer's output dim) ------
    if H % 128 == 0:
        tn = 128
        chain_fixed = 4 * tm_chain * H * xb + 2 * tm_chain * H * 4
        for cand in range(128, H + 1, 128):
            if H % cand == 0 and 2 * cand * H * rb + chain_fixed <= budget:
                tn = cand
    else:
        tn = H  # small / irregular hidden size: full-width weight block

    # ---- pad inputs ---------------------------------------------------------
    x_pad = jnp.pad(x, ((0, M_pad - M), (0, 0))) if M_pad != M else x
    w_out_pad = (jnp.pad(out_weight, ((0, V_pad - V), (0, 0)))
                 if V_pad != V else out_weight)

    # ---- stage 1: ResBlock chain --------------------------------------------
    if L > 0:
        w_stack = jnp.stack(block_weights)                             # (L, H, H)
        b_stack = jnp.stack([b.reshape(1, H) for b in block_biases])   # (L, 1, H)
        x_res = _resblock_chain(x_pad, w_stack, b_stack,
                                tm=tm_chain, tn=tn, vmem_limit=budget)
    else:
        x_res = x_pad

    # ---- stage 2: vocab-streamed projection ---------------------------------
    try:
        y = _projection(x_res, w_out_pad, tm=tm_proj, tv=tv, out_dtype=out_dtype,
                        vmem_limit=budget, wout_buffers=3)
        y = jax.block_until_ready(y)
    except Exception:
        # Fallback if deeper multi-buffering is unsupported on this jax build.
        y = _projection(x_res, w_out_pad, tm=tm_proj, tv=tv, out_dtype=out_dtype,
                        vmem_limit=budget, wout_buffers=None)

    if M_pad != M or V_pad != V:
        y = y[:M, :V]
    return y


def medusa_head_ref(x, block_weights, block_biases, out_weight):
    """Pure-JAX reference mirroring the PyTorch module exactly."""
    x = x.astype(jnp.float32)
    for w, b in zip(block_weights, block_biases):
        h = x @ w.T.astype(jnp.float32) + b.astype(jnp.float32)
        x = x + jax.nn.silu(h)
    return x @ out_weight.T.astype(jnp.float32)


if __name__ == "__main__":
    # Small shapes consistent with the module:
    #   batch=2, seq=8 -> M = 16 tokens, hidden H = 32,
    #   medusa_num_layers = 2, vocab V = 64.
    batch, seq, H, V, L = 2, 8, 32, 64, 2
    M = batch * seq

    key = jax.random.PRNGKey(0)
    keys = jax.random.split(key, 2 * L + 2)

    x = jax.random.normal(keys[0], (M, H), dtype=jnp.float32)
    block_weights = [
        0.1 * jax.random.normal(keys[1 + i], (H, H), dtype=jnp.float32)
        for i in range(L)
    ]
    block_biases = [
        0.05 * jax.random.normal(keys[1 + L + i], (H,), dtype=jnp.float32)
        for i in range(L)
    ]
    out_weight = 0.1 * jax.random.normal(keys[-1], (V, H), dtype=jnp.float32)

    y = medusa_head_pallas(x, block_weights, block_biases, out_weight)
    y = jax.block_until_ready(y)

    y_ref = medusa_head_ref(x, block_weights, block_biases, out_weight)
    assert y.shape == (M, V)
    max_err = float(jnp.max(jnp.abs(y - y_ref)))
    assert jnp.allclose(y, y_ref, atol=1e-4, rtol=1e-4), max_err

    print("KERNEL_OK")
</pallas_src>

<mosaic_0001>
module attributes {stable_mosaic.version = 11 : i64} {
  func.func @kernel(%arg0: i32, %arg1: i32, %arg2: i32, %arg3: memref<16x32xf32, #tpu.memory_space<vmem>>, %arg4: memref<1x32x32xf32, #tpu.memory_space<vmem>>, %arg5: memref<1x1x32xf32, #tpu.memory_space<vmem>>, %arg6: memref<16x32xf32, #tpu.memory_space<vmem>>, %arg7: memref<16x32xf32, #tpu.memory_space<vmem>>, %arg8: memref<1x16x32xf32, #tpu.memory_space<vmem>>) attributes {dimension_semantics = [#tpu.dimension_semantics<parallel>, #tpu.dimension_semantics<arbitrary>, #tpu.dimension_semantics<arbitrary>], iteration_bounds = array<i64: 1, 2, 1>, scalar_prefetch = 0 : i64, scratch_operands = 2 : i64, tpu.core_type = #tpu.core_type<tc>, window_params = [{transform_indices = @transform_0, window_bounds = array<i64: 16, 32>}, {transform_indices = @transform_1, window_bounds = array<i64: 1, 32, 32>}, {transform_indices = @transform_2, window_bounds = array<i64: 1, 1, 32>}, {transform_indices = @transform_3, window_bounds = array<i64: 16, 32>}]} {
    %c0_i32 = arith.constant 0 : i32
    %0 = arith.cmpi eq, %arg1, %c0_i32 : i32
    %c0_i32_0 = arith.constant 0 : i32
    %1 = arith.cmpi eq, %arg2, %c0_i32_0 : i32
    %2 = arith.andi %0, %1 : i1
    %3 = arith.extui %2 : i1 to i32
    %c0_i32_1 = arith.constant 0 : i32
    %4 = arith.cmpi ne, %3, %c0_i32_1 : i32
    scf.if %4 {
      %c0_15 = arith.constant 0 : index
      %c0_16 = arith.constant 0 : index
      %25 = vector.load %arg3[%c0_15, %c0_16] : memref<16x32xf32, #tpu.memory_space<vmem>>, vector<16x32xf32>
      %c0_17 = arith.constant 0 : index
      %c0_18 = arith.constant 0 : index
      %26 = vector.load %arg7[%c0_17, %c0_18] : memref<16x32xf32, #tpu.memory_space<vmem>>, vector<16x32xf32>
      tpu.vector_store %arg7[%c0_17, %c0_18], %25 {strides = array<i32>} : memref<16x32xf32, #tpu.memory_space<vmem>>, vector<16x32xf32>,
    } else {
    }
    %c0 = arith.constant 0 : index
    %c0_2 = arith.constant 0 : index
    %5 = vector.load %arg7[%c0, %c0_2] : memref<16x32xf32, #tpu.memory_space<vmem>>, vector<16x32xf32>
    %c0_3 = arith.constant 0 : index
    %c0_4 = arith.constant 0 : index
    %c0_5 = arith.constant 0 : index
    %6 = vector.load %arg4[%c0_3, %c0_4, %c0_5] : memref<1x32x32xf32, #tpu.memory_space<vmem>>, vector<1x32x32xf32>
    %7 = vector.shape_cast %6 : vector<1x32x32xf32> to vector<32x32xf32>
    %cst = arith.constant dense<0.000000e+00> : vector<16x32xf32>
    %8 = tpu.matmul %5, %7, %cst {dimension_numbers = #tpu.dot_dimension_numbers<[1], [1], [0], [0], [0, 0, 1, 0], [], []>} : vector<16x32xf32>, vector<32x32xf32>, vector<16x32xf32> -> vector<16x32xf32>
    %c0_6 = arith.constant 0 : index
    %c0_7 = arith.constant 0 : index
    %c0_8 = arith.constant 0 : index
    %9 = vector.load %arg5[%c0_6, %c0_7, %c0_8] : memref<1x1x32xf32, #tpu.memory_space<vmem>>, vector<1x1x32xf32>
    %10 = vector.shape_cast %9 : vector<1x1x32xf32> to vector<1x32xf32>
    %11 = vector.broadcast %10 : vector<1x32xf32> to vector<16x32xf32>
    %12 = arith.addf %8, %11 : vector<16x32xf32>
    %13 = arith.index_cast %arg2 : i32 to index
    %c0_9 = arith.constant 0 : index
    %c0_10 = arith.constant 0 : index
    %14 = vector.load %arg8[%13, %c0_9, %c0_10] : memref<1x16x32xf32, #tpu.memory_space<vmem>>, vector<1x16x32xf32>
    %15 = vector.shape_cast %14 : vector<1x16x32xf32> to vector<16x32xf32>
    %16 = vector.shape_cast %12 : vector<16x32xf32> to vector<1x16x32xf32>
    tpu.vector_store %arg8[%13, %c0_9, %c0_10], %16 {strides = array<i32>} : memref<1x16x32xf32, #tpu.memory_space<vmem>>, vector<1x16x32xf32>,
    %c0_i32_11 = arith.constant 0 : i32
    %17 = arith.cmpi eq, %arg2, %c0_i32_11 : i32
    %18 = arith.extui %17 : i1 to i32
    %c0_i32_12 = arith.constant 0 : i32
    %19 = arith.cmpi ne, %18, %c0_i32_12 : i32
    scf.if %19 {
      %c0_15 = arith.constant 0 : index
      %c0_16 = arith.constant 0 : index
      %c0_17 = arith.constant 0 : index
      %25 = vector.load %arg8[%c0_15, %c0_16, %c0_17] : memref<1x16x32xf32, #tpu.memory_space<vmem>>, vector<1x16x32xf32>
      %26 = vector.shape_cast %25 : vector<1x16x32xf32> to vector<16x32xf32>
      %c0_18 = arith.constant 0 : index
      %c0_19 = arith.constant 0 : index
      %27 = vector.load %arg7[%c0_18, %c0_19] : memref<16x32xf32, #tpu.memory_space<vmem>>, vector<16x32xf32>
      %28 = arith.negf %26 : vector<16x32xf32>
      %29 = math.exp %28 : vector<16x32xf32>
      %cst_20 = arith.constant 1.000000e+00 : f32
      %30 = vector.broadcast %cst_20 : f32 to vector<16x32xf32>
      %31 = arith.addf %30, %29 : vector<16x32xf32>
      %32 = arith.divf %30, %31 : vector<16x32xf32>
      %33 = arith.mulf %26, %32 : vector<16x32xf32>
      %34 = arith.addf %27, %33 : vector<16x32xf32>
      %c0_21 = arith.constant 0 : index
      %c0_22 = arith.constant 0 : index
      %35 = vector.load %arg7[%c0_21, %c0_22] : memref<16x32xf32, #tpu.memory_space<vmem>>, vector<16x32xf32>
      tpu.vector_store %arg7[%c0_21, %c0_22], %34 {strides = array<i32>} : memref<16x32xf32, #tpu.memory_space<vmem>>, vector<16x32xf32>,
    } else {
    }
    %c1_i32 = arith.constant 1 : i32
    %20 = arith.cmpi eq, %arg1, %c1_i32 : i32
    %c0_i32_13 = arith.constant 0 : i32
    %21 = arith.cmpi eq, %arg2, %c0_i32_13 : i32
    %22 = arith.andi %20, %21 : i1
    %23 = arith.extui %22 : i1 to i32
    %c0_i32_14 = arith.constant 0 : i32
    %24 = arith.cmpi ne, %23, %c0_i32_14 : i32
    scf.if %24 {
      %c0_15 = arith.constant 0 : index
      %c0_16 = arith.constant 0 : index
      %25 = vector.load %arg7[%c0_15, %c0_16] : memref<16x32xf32, #tpu.memory_space<vmem>>, vector<16x32xf32>
      %c0_17 = arith.constant 0 : index
      %c0_18 = arith.constant 0 : index
      %26 = vector.load %arg6[%c0_17, %c0_18] : memref<16x32xf32, #tpu.memory_space<vmem>>, vector<16x32xf32>
      tpu.vector_store %arg6[%c0_17, %c0_18], %25 {strides = array<i32>} : memref<16x32xf32, #tpu.memory_space<vmem>>, vector<16x32xf32>,
    } else {
    }
    return
  }
  func.func @transform_0(%arg0: i32, %arg1: i32, %arg2: i32) -> (i32, i32) {
    %c0_i32 = arith.constant 0 : i32
    %c0_i32_0 = arith.constant 0 : i32
    return %arg0, %c0_i32 : i32, i32
  }
  func.func @transform_1(%arg0: i32, %arg1: i32, %arg2: i32) -> (i32, i32, i32) {
    %c0_i32 = arith.constant 0 : i32
    %c0_i32_0 = arith.constant 0 : i32
    return %arg1, %arg2, %c0_i32 : i32, i32, i32
  }
  func.func @transform_2(%arg0: i32, %arg1: i32, %arg2: i32) -> (i32, i32, i32) {
    %c0_i32 = arith.constant 0 : i32
    %c0_i32_0 = arith.constant 0 : i32
    return %arg1, %c0_i32, %arg2 : i32, i32, i32
  }
  func.func @transform_3(%arg0: i32, %arg1: i32, %arg2: i32) -> (i32, i32) {
    %c0_i32 = arith.constant 0 : i32
    %c0_i32_0 = arith.constant 0 : i32
    return %arg0, %c0_i32 : i32, i32
  }
}

</mosaic_0001>

<llo_original>
// kernel: tpu_custom_call.1
$region0: #{tpu_custom_call.1}
  #allocation0 [shape = 'u32[]', space=smem, size = 0x4, offset = 0x4, fixed_abs, tag = 'smem constant byte address 0x4 - core index']
  #allocation1 [shape = 'u32[144,128]{1,0:T(1,128)}', space=vmem, size = 0x12000, scoped, tag = 'internal scratch']
  #allocation2 [shape = 'f32[16,32]{1,0:T(8,128)}', space=vmem, size = 0x2000, scoped, tag = 'scratch operand']
  #allocation3 [shape = 'f32[1,16,32]{2,1,0:T(8,128)}', space=vmem, size = 0x2000, scoped, tag = 'scratch operand']
  %s0 = inlined_call_operand.hbm [shape: f32[16,32], index: 0, kind: input, shape index: {}]
  %s1 = inlined_call_operand.hbm [shape: f32[2,32,32], index: 1, kind: input, shape index: {}]
  %s2 = inlined_call_operand.vmem [shape: f32[2,1,32], index: 2, kind: input, shape index: {}]
  %s3 = inlined_call_operand.hbm [shape: f32[16,32], index: 3, kind: output, shape index: {}]
  %s4 = sld [smem:[#allocation0]]
  $region65: #{tpu_custom_call.1} parent=0
    _
  %s6 = ssub.s32 1, %s4
  %s7 = scalar_select 0, %s6, %s4
  $region1: #{tpu_custom_call.1} parent=0
    #allocation4 [shape = 'u8[8192]{0}', space=vmem, size = 0x2000, scoped, tag = 'input window, operand 0, single buffered']
    #allocation5 [shape = 's32[2]{0}', space=sflag, size = 0x8, scoped, tag = 'scoped memory for tpu_custom_call.1']
    #allocation6 [shape = 's32[2]{0}', space=sflag, size = 0x8, scoped, tag = 'scoped memory for tpu_custom_call.1']
    #allocation7 [shape = 'u8[32768]{0}', space=vmem, size = 0x8000, scoped, tag = 'input window, operand 1']
    #allocation8 [shape = 's32[2]{0}', space=sflag, size = 0x8, scoped, tag = 'scoped memory for tpu_custom_call.1']
    #allocation9 [shape = 'u8[8192]{0}', space=vmem, size = 0x2000, scoped, tag = 'output window, operand 0, single buffered']
    %8 = vsyncpa [#allocation5], 0
    %9 = vsyncpa [#allocation8], 0
    %s10 = scalar_lea.sflag [#allocation8], 1
    %11 = vsyncpa %s10, 0
    %12 = vsyncpa [#allocation6], 0
    loop: start=0, step=1, limit=4
    $region2: #{tpu_custom_call.1} parent=1 // loop_pre_header
      _
    $region3: #{tpu_custom_call.1} parent=1 // loop_header
      %s14 = sphi 0, %s18
      %p15 = scmp.ge.s32.totalorder %s14, 4
      %s21 = sphi 0, %s40
      %s22 = sphi 0, %s36
      %s23 = sphi 0, %s32
      %s24 = sphi 0, %s21
      %s25 = sphi 0, %s22
      %s26 = sphi 0, %s23
      %s27 = sphi 0, %s24
      %s28 = sphi 0, %s25
      %s29 = sphi 0, %s26
      %s43 = sphi 0, %s45
      %s46 = sphi 0, %s43
      %s47 = sphi 0, %s46
      %s63 = sphi 0, %s47
      %s71 = sphi 0, %s73
      %s74 = sphi 0, %s71
      %s75 = sphi 0, %s74
      %s91 = sphi 0, %s75
      %s99 = sphi 0, %s101
      %s102 = sphi 0, %s99
      %s103 = sphi 0, %s102
      %s119 = sphi 0, %s103
      %s125 = sphi 0, %s127
      %s128 = sphi 0, %s125
      %s129 = sphi 0, %s128
      %s145 = sphi 0, %s129
    $region4: #{tpu_custom_call.1} parent=1 // loop_header_branch
      %17 = sbr.rel (%p15) target = $region8
    $region5: #{tpu_custom_call.1} parent=1 // loop_body
      %s19 = ssub.s32 %s14, 1
      %s20 = ssub.s32 %s14, 2
      %s30 = sadd.s32 1, %s23
      %p31 = scmp.ge.s32.totalorder %s30, 1
      %s32 = scalar_select %p31, 0, %s30
      %s33 = sadd.s32 1, %s22
      %s34 = scalar_select %p31, %s33, %s22
      %p35 = scmp.ge.s32.totalorder %s34, 2
      %s36 = scalar_select %p35, 0, %s34
      %s37 = sadd.s32 1, %s21
      %s38 = scalar_select %p35, %s37, %s21
      %p39 = scmp.ge.s32.totalorder %s38, 1
      %s40 = scalar_select %p39, 0, %s38
      %s41 = ssub.s32 %s21, %s40
      %p42 = scmp.eq.s32.totalorder %s41, 0
      %s44 = sadd.s32 %s43, 1
      %s45 = scalar_select %p42, %s43, %s44
      %p48 = pneg %p42
      %p49 = scmp.eq.s32.totalorder %s14, 1
      %p50 = por %p48, %p49
      %p51 = scmp.ne.s32.totalorder %s43, %s46
      %p52 = scmp.eq.s32.totalorder %s14, 0
      %p53 = por %p51, %p52
      %p54 = scmp.ne.s32.totalorder %s43, %s46
      %p55 = scmp.eq.s32.totalorder %s19, 1
      %p56 = por %p54, %p55
      %p57 = scmp.ne.s32.totalorder %s46, %s47
      %p58 = scmp.eq.s32.totalorder %s19, 0
      %p59 = por %p57, %p58
      %p60 = scmp.ne.s32.totalorder %s46, %s47
      %p61 = scmp.eq.s32.totalorder %s20, 1
      %p62 = por %p60, %p61
      %p64 = scmp.ne.s32.totalorder %s47, %s63
      %p65 = scmp.eq.s32.totalorder %s20, 0
      %p66 = por %p64, %p65
      %s67 = ssub.s32 %s22, %s36
      %s68 = ssub.s32 %s23, %s32
      %s69 = sor.u32 %s67, %s68
      %p70 = scmp.eq.s32.totalorder %s69, 0
      %s72 = sadd.s32 %s71, 1
      %s73 = scalar_select %p70, %s71, %s72
      %p76 = pneg %p70
      %p77 = scmp.eq.s32.totalorder %s14, 1
      %p78 = por %p76, %p77
      %p79 = scmp.ne.s32.totalorder %s71, %s74
      %p80 = scmp.eq.s32.totalorder %s14, 0
      %p81 = por %p79, %p80
      %p82 = scmp.ne.s32.totalorder %s71, %s74
      %p83 = scmp.eq.s32.totalorder %s19, 1
      %p84 = por %p82, %p83
      %p85 = scmp.ne.s32.totalorder %s74, %s75
      %p86 = scmp.eq.s32.totalorder %s19, 0
      %p87 = por %p85, %p86
      %p88 = scmp.ne.s32.totalorder %s74, %s75
      %p89 = scmp.eq.s32.totalorder %s20, 1
      %p90 = por %p88, %p89
      %p92 = scmp.ne.s32.totalorder %s75, %s91
      %p93 = scmp.eq.s32.totalorder %s20, 0
      %p94 = por %p92, %p93
      %s95 = ssub.s32 %s22, %s36
      %s96 = ssub.s32 %s23, %s32
      %s97 = sor.u32 %s95, %s96
      %p98 = scmp.eq.s32.totalorder %s97, 0
      %s100 = sadd.s32 %s99, 1
      %s101 = scalar_select %p98, %s99, %s100
      %p104 = pneg %p98
      %p105 = scmp.eq.s32.totalorder %s14, 1
      %p106 = por %p104, %p105
      %p107 = scmp.ne.s32.totalorder %s99, %s102
      %p108 = scmp.eq.s32.totalorder %s14, 0
      %p109 = por %p107, %p108
      %p110 = scmp.ne.s32.totalorder %s99, %s102
      %p111 = scmp.eq.s32.totalorder %s19, 1
      %p112 = por %p110, %p111
      %p113 = scmp.ne.s32.totalorder %s102, %s103
      %p114 = scmp.eq.s32.totalorder %s19, 0
      %p115 = por %p113, %p114
      %p116 = scmp.ne.s32.totalorder %s102, %s103
      %p117 = scmp.eq.s32.totalorder %s20, 1
      %p118 = por %p116, %p117
      %p120 = scmp.ne.s32.totalorder %s103, %s119
      %p121 = scmp.eq.s32.totalorder %s20, 0
      %p122 = por %p120, %p121
      %s123 = ssub.s32 %s21, %s40
      %p124 = scmp.eq.s32.totalorder %s123, 0
      %s126 = sadd.s32 %s125, 1
      %s127 = scalar_select %p124, %s125, %s126
      %p130 = pneg %p124
      %p131 = scmp.eq.s32.totalorder %s14, 1
      %p132 = por %p130, %p131
      %p133 = scmp.ne.s32.totalorder %s125, %s128
      %p134 = scmp.eq.s32.totalorder %s14, 0
      %p135 = por %p133, %p134
      %p136 = scmp.ne.s32.totalorder %s125, %s128
      %p137 = scmp.eq.s32.totalorder %s19, 1
      %p138 = por %p136, %p137
      %p139 = scmp.ne.s32.totalorder %s128, %s129
      %p140 = scmp.eq.s32.totalorder %s19, 0
      %p141 = por %p139, %p140
      %p142 = scmp.ne.s32.totalorder %s128, %s129
      %p143 = scmp.eq.s32.totalorder %s20, 1
      %p144 = por %p142, %p143
      %p146 = scmp.ne.s32.totalorder %s129, %s145
      %p147 = scmp.eq.s32.totalorder %s20, 0
      %p148 = por %p146, %p147
      %p149 = scmp.le.s32.totalorder 1, %s14
      %p150 = scmp.lt.s32.totalorder %s14, 3
      %p151 = pnand %p149, %p150
      %p152 = pneg %p151
      // Predicated region
      $region9: #{tpu_custom_call.1} parent=5 // pred_check
        _
      $region10: #{tpu_custom_call.1} parent=5 // pred_check_branch
        %154 = sbr.rel (%p151) target = $region12
      $region11: #{tpu_custom_call.1} parent=5 // pred_region
        %s155 = ssub.s32 %s14, 1
        // Predicated region
        $region13: #{tpu_custom_call.1} parent=11 // pred_check
          %p156 = pneg %p59
        $region14: #{tpu_custom_call.1} parent=11 // pred_check_branch
          %158 = sbr.rel (%p156) target = $region16
        $region15: #{tpu_custom_call.1} parent=11 // pred_region
          %s159 = smul.u32 2, %s24
          %s161 = ssub.s32 256, 256
          %162 = vsyncadd [#allocation5], %s161
          %s163 = smul.addr %s159, 128
          %s164 = scalar_lea.hbm %s0, %s163
          %s165 = sshll.u32 [#allocation4], 4
          %s166 = int_to_ptr.vmem [resolvable:$true] %s165
          %171 = dma.hbm_to_vmem [thread:$0]  %s164, 256, %s166, [#allocation5], 128, 128, 8
        $region16: #{tpu_custom_call.1} parent=11 // pred_fallthru
          _
      $region12: #{tpu_custom_call.1} parent=5 // pred_fallthru
        _
      %p172 = scmp.lt.s32.totalorder %s14, 2
      // Predicated region
      $region17: #{tpu_custom_call.1} parent=5 // pred_check
        %p173 = pneg %p172
      $region18: #{tpu_custom_call.1} parent=5 // pred_check_branch
        %175 = sbr.rel (%p173) target = $region20
      $region19: #{tpu_custom_call.1} parent=5 // pred_region
        // Predicated region
        $region21: #{tpu_custom_call.1} parent=19 // pred_check
          %p176 = pneg %p81
        $region22: #{tpu_custom_call.1} parent=19 // pred_check_branch
          %178 = sbr.rel (%p176) target = $region24
        $region23: #{tpu_custom_call.1} parent=19 // pred_region
          %s179 = sand.u32 %s71, 1
          %s180 = scalar_lea.sflag [#allocation8], %s179
          %s181 = sand.u32 %s71, 1
          %s182 = smul.addr %s181, 32
          %s183 = scalar_lea.vmem [#allocation7], %s182
          %s184 = smul.u32 4, %s23
          %s186 = ssub.s32 512, 512
          %187 = vsyncadd %s180, %s186
          %s188 = smul.addr %s22, 4
          %s189 = sadd.s32 %s184, %s188
          %s190 = smul.addr %s189, 128
          %s191 = scalar_lea.hbm %s1, %s190
          %s192 = sshll.u32 %s183, 4
          %s193 = int_to_ptr.vmem [resolvable:$true] %s192
          %198 = dma.hbm_to_vmem [thread:$0]  %s191, 512, %s193, %s180, 128, 128, 8
        $region24: #{tpu_custom_call.1} parent=19 // pred_fallthru
          _
        // Predicated region
        $region25: #{tpu_custom_call.1} parent=19 // pred_check
          %p199 = pneg %p109
        $region26: #{tpu_custom_call.1} parent=19 // pred_check_branch
          %201 = sbr.rel (%p199) target = $region28
        $region27: #{tpu_custom_call.1} parent=19 // pred_region
          %p202 = scmp.lt.s32.totalorder %s22, 1
          %s203 = scalar_select %p202, %s22, 1
          %p204 = scmp.lt.s32.totalorder %s23, 0
          %s205 = scalar_select %p204, %s23, 0
          %s206 = sadd.s32 %s205, %s203
          %s207 = scalar_lea.vmem %s2, %s206
        $region28: #{tpu_custom_call.1} parent=19 // pred_fallthru
          _
      $region20: #{tpu_custom_call.1} parent=5 // pred_fallthru
        _
      %p208 = scmp.le.s32.totalorder 1, %s14
      %p209 = scmp.lt.s32.totalorder %s14, 3
      %p210 = pnand %p208, %p209
      %p211 = pneg %p210
      // Predicated region
      $region29: #{tpu_custom_call.1} parent=5 // pred_check
        _
      $region30: #{tpu_custom_call.1} parent=5 // pred_check_branch
        %213 = sbr.rel (%p210) target = $region32
      $region31: #{tpu_custom_call.1} parent=5 // pred_region
        %s214 = ssub.s32 %s14, 1
        // Predicated region
        $region33: #{tpu_custom_call.1} parent=31 // pred_check
          %p215 = pneg %p59
        $region34: #{tpu_custom_call.1} parent=31 // pred_check_branch
          %217 = sbr.rel (%p215) target = $region36
        $region35: #{tpu_custom_call.1} parent=31 // pred_region
          %218 = dma.done [#allocation5], 256
        $region36: #{tpu_custom_call.1} parent=31 // pred_fallthru
          _
        %s219 = sand.u32 %s74, 1
        %s220 = scalar_lea.sflag [#allocation8], %s219
        %s221 = sand.u32 %s74, 1
        %s222 = smul.addr %s221, 32
        %s223 = scalar_lea.vmem [#allocation7], %s222
        // Predicated region
        $region37: #{tpu_custom_call.1} parent=31 // pred_check
          %p224 = pneg %p87
        $region38: #{tpu_custom_call.1} parent=31 // pred_check_branch
          %226 = sbr.rel (%p224) target = $region40
        $region39: #{tpu_custom_call.1} parent=31 // pred_region
          %227 = dma.done %s220, 512
        $region40: #{tpu_custom_call.1} parent=31 // pred_fallthru
          _
        %p228 = pneg %p59
        %p229 = pneg %p56
        %s230 = sand.u32 %s74, 1
        %s231 = scalar_lea.sflag [#allocation8], %s230
        %s232 = sand.u32 %s74, 1
        %s233 = smul.addr %s232, 32
        %s234 = scalar_lea.vmem [#allocation7], %s233
        %p235 = pneg %p87
        %p236 = pneg %p84
        %p237 = scmp.lt.s32.totalorder %s25, 1
        %s238 = scalar_select %p237, %s25, 1
        %p239 = scmp.lt.s32.totalorder %s26, 0
        %s240 = scalar_select %p239, %s26, 0
        %s241 = sadd.s32 %s240, %s238
        %s242 = scalar_lea.vmem %s2, %s241
        %p243 = pneg %p115
        %p244 = pneg %p112
        %p245 = pneg %p141
        %p246 = pneg %p138
        %s247 = smul.u32 2, %s24
        %s248 = smul.u32 4, %s26
        %p249 = scmp.lt.s32.totalorder %s25, 1
        %s250 = scalar_select %p249, %s25, 1
        %p251 = scmp.lt.s32.totalorder %s26, 0
        %s252 = scalar_select %p251, %s26, 0
        %s253 = sadd.s32 %s252, %s250
        %s254 = scalar_lea.vmem %s2, %s253
        %s255 = smul.u32 2, %s24
        %p256 = scmp.eq.s32.totalorder %s25, 0
        %p257 = scmp.eq.s32.totalorder %s26, 0
        %p258 = pnand %p256, %p257
        %p259 = pneg %p258
        // Predicated region
        $region41: #{tpu_custom_call.1} parent=31 // pred_check
          _
        $region42: #{tpu_custom_call.1} parent=31 // pred_check_branch
          %261 = sbr.rel (%p258) target = $region44
        $region43: #{tpu_custom_call.1} parent=31 // pred_region
          %v262 = vld [vmem:[#allocation4] sm:$0xff]
          %v263 = vld [vmem:[#allocation4 + $0x8] sm:$0xff]
          %vm264 = vcmask 261120
          %265 = vst.msk [vmem:[#allocation2] sm:$0xff] %vm264, %v262
          %266 = vst.msk [vmem:[#allocation2 + $0x8] sm:$0xff] %vm264, %v263
        $region44: #{tpu_custom_call.1} parent=31 // pred_fallthru
          _
        %v267 = vld [vmem:[#allocation2] sm:$0xff]
        %v268 = vld [vmem:[#allocation2 + $0x8] sm:$0xff]
        %v269 = vld [vmem:[%s223] sm:$0xff]
        %v270 = vld [vmem:[%s223 + $0x8] sm:$0xff]
        %v271 = vld [vmem:[%s223 + $0x10] sm:$0xff]
        %v272 = vld [vmem:[%s223 + $0x18] sm:$0xff]
        %v273 = vld [vmem:[%s254] sm:$0x1]
        %v275 = vlaneseq
        %v276 = vshrl.u32 %v275, 7
        %v277 = vsub.s32 0, %v276
        %v278 = vrot.slane %v273, %v277
        %vm280 = vcmask 261120
        %v282 = vsel %vm280, %v267, 0
        %v285 = vsel %vm280, %v268, 0
        %v288 = vsel %vm280, %v269, 0
        %v291 = vsel %vm280, %v270, 0
        %v294 = vsel %vm280, %v271, 0
        %v297 = vsel %vm280, %v272, 0
        %299 = vmatprep.subr.mxu0 0.0
        %300 = vmatpush1.xpose.msra.mxu0 %v288
        %301 = vmatprep.subr.mxu0 0.0
        %302 = vmatpush1.xpose.msra.mxu0 %v291
        %303 = vmatprep.subr.mxu0 0.0
        %304 = vmatpush1.xpose.msra.mxu0 %v294
        %305 = vmatprep.subr.mxu0 0.0
        %306 = vmatpush1.xpose.msra.mxu0 %v297
        %307 = vmatprep.subr.mxu0 0.0
        %308 = vmatpush1.xpose.msra.mxu0 0.0
        %309 = vmatprep.subr.mxu0 0.0
        %310 = vmatpush1.xpose.msra.mxu0 0.0
        %311 = vmatprep.subr.mxu0 0.0
        %312 = vmatpush1.xpose.msra.mxu0 0.0
        %313 = vmatprep.subr.mxu0 0.0
        %314 = vmatpush1.xpose.msra.mxu0 0.0
        %315 = vmatprep.subr.mxu0 0.0
        %316 = vmatpush1.xpose.msra.mxu0 0.0
        %317 = vmatprep.subr.mxu0 0.0
        %318 = vmatpush1.xpose.msra.mxu0 0.0
        %319 = vmatprep.subr.mxu0 0.0
        %320 = vmatpush1.xpose.msra.mxu0 0.0
        %321 = vmatprep.subr.mxu0 0.0
        %322 = vmatpush1.xpose.msra.mxu0 0.0
        %323 = vmatprep.subr.mxu0 0.0
        %324 = vmatpush1.xpose.msra.mxu0 0.0
        %325 = vmatprep.subr.mxu0 0.0
        %326 = vmatpush1.xpose.msra.mxu0 0.0
        %327 = vmatprep.subr.mxu0 0.0
        %328 = vmatpush1.xpose.msra.mxu0 0.0
        %329 = vmatprep.subr.mxu0 0.0
        %330 = vmatpush1.xpose.msra.mxu0 0.0
        %331 = vmatprep.subr.mxu0 0.0
        %332 = vmatpush1.xpose.msra.mxu0 0.0
        %333 = vmatprep.subr.mxu0 0.0
        %334 = vmatpush1.xpose.msra.mxu0 0.0
        %335 = vmatprep.subr.mxu0 0.0
        %336 = vmatpush1.xpose.msra.mxu0 0.0
        %337 = vmatprep.subr.mxu0 0.0
        %338 = vmatpush1.xpose.msra.mxu0 0.0
        %339 = vmatprep.subr.mxu0 0.0
        %340 = vmatpush1.xpose.msra.mxu0 0.0
        %341 = vmatprep.subr.mxu0 0.0
        %342 = vmatpush1.xpose.msra.mxu0 0.0
        %343 = vmatprep.subr.mxu0 0.0
        %344 = vmatpush1.xpose.msra.mxu0 0.0
        %345 = vmatprep.subr.mxu0 0.0
        %346 = vmatpush1.xpose.msra.mxu0 0.0
        %347 = vmatprep.subr.mxu0 0.0
        %348 = vmatpush1.xpose.msra.mxu0 0.0
        %349 = vmatprep.subr.mxu0 0.0
        %350 = vmatpush1.xpose.msra.mxu0 0.0
        %351 = vmatprep.subr.mxu0 0.0
        %352 = vmatpush1.xpose.msra.mxu0 0.0
        %353 = vmatprep.subr.mxu0 0.0
        %354 = vmatpush1.xpose.msra.mxu0 0.0
        %355 = vmatprep.subr.mxu0 0.0
        %356 = vmatpush1.xpose.msra.mxu0 0.0
        %357 = vmatprep.subr.mxu0 0.0
        %358 = vmatpush1.xpose.msra.mxu0 0.0
        %359 = vmatprep.subr.mxu0 0.0
        %360 = vmatpush1.xpose.msra.mxu0 0.0
        %361 = vmatprep.subr.mxu0 0.0
        %362 = vmatpush1.xpose.msra.mxu0 0.0
        %363 = vmatprep.mubr.f32.mxu0 0.0
        %364 = vmatmul.mubr.f32.gmra.mrb[0].mxu0 %v282
        %v365 = vpop.f32.mrb[0].mxu0
        %v366 = vadd.f32 %v278, %v365
        %v367 = vpop.f32.mrb[0].mxu0
        %368 = vmatprep.mubr.f32.mxu0 0.0
        %369 = vmatmul.mubr.f32.gmra.mrb[0].mxu0 %v285
        %v370 = vpop.f32.mrb[0].mxu0
        %v371 = vadd.f32 %v278, %v370
        %v372 = vpop.f32.mrb[0].mxu0
        %373 = vdwg.mxu0
        %s374 = smul.u32 %s26, 16
        %s375 = scalar_lea.vmem [#allocation3], %s374
        %376 = vst.msk [vmem:[%s375] sm:$0xff] %vm280, %v366
        %377 = vst.msk [vmem:[%s375 + $0x8] sm:$0xff] %vm280, %v371
        // Predicated region
        $region45: #{tpu_custom_call.1} parent=31 // pred_check
          %p378 = pneg %p257
        $region46: #{tpu_custom_call.1} parent=31 // pred_check_branch
          %380 = sbr.rel (%p378) target = $region48
        $region47: #{tpu_custom_call.1} parent=31 // pred_region
          %v381 = vld [vmem:[#allocation3] sm:$0xff]
          %v382 = vld [vmem:[#allocation3 + $0x8] sm:$0xff]
          %v383 = vld [vmem:[#allocation2] sm:$0xff]
          %v384 = vld [vmem:[#allocation2 + $0x8] sm:$0xff]
          %v385 = vxor.u32 %v381, 2147483648
          %v386 = vxor.u32 %v382, 2147483648
          %v387 = vmul.f32 %v385, 1.442695
          %v388 = vpow.pop %v387
          %v389 = vmul.f32 %v386, 1.442695
          %v390 = vpow.pop %v389
          %v391 = vadd.f32 %v388, 1.0
          %v392 = vadd.f32 %v390, 1.0
          %v393 = vrcp.pop %v391
          %v394 = vmul.f32 1.0, %v393
          %v395 = vrcp.pop %v392
          %v396 = vmul.f32 1.0, %v395
          %v397 = vmul.f32 %v381, %v394
          %v398 = vmul.f32 %v382, %v396
          %v399 = vadd.f32 %v383, %v397
          %v400 = vadd.f32 %v384, %v398
          %401 = vst.msk [vmem:[#allocation2] sm:$0xff] %vm280, %v399
          %402 = vst.msk [vmem:[#allocation2 + $0x8] sm:$0xff] %vm280, %v400
        $region48: #{tpu_custom_call.1} parent=31 // pred_fallthru
          _
        %p403 = scmp.eq.s32.totalorder %s25, 1
        %p404 = pnand %p403, %p257
        %p405 = pneg %p404
        // Predicated region
        $region49: #{tpu_custom_call.1} parent=31 // pred_check
          _
        $region50: #{tpu_custom_call.1} parent=31 // pred_check_branch
          %407 = sbr.rel (%p404) target = $region52
        $region51: #{tpu_custom_call.1} parent=31 // pred_region
          %v408 = vld [vmem:[#allocation2] sm:$0xff]
          %v409 = vld [vmem:[#allocation2 + $0x8] sm:$0xff]
          %410 = vst.msk [vmem:[#allocation9] sm:$0xff] %vm280, %v408
          %411 = vst.msk [vmem:[#allocation9 + $0x8] sm:$0xff] %vm280, %v409
        $region52: #{tpu_custom_call.1} parent=31 // pred_fallthru
          _
        // Predicated region
        $region53: #{tpu_custom_call.1} parent=31 // pred_check
          %p412 = pneg %p138
        $region54: #{tpu_custom_call.1} parent=31 // pred_check_branch
          %414 = sbr.rel (%p412) target = $region56
        $region55: #{tpu_custom_call.1} parent=31 // pred_region
          %s415 = smul.u32 2, %s24
          %s417 = ssub.s32 256, 256
          %418 = vsyncadd [#allocation6], %s417
          %s419 = smul.addr %s415, 128
          %s420 = scalar_lea.hbm %s3, %s419
          %s421 = sshll.u32 [#allocation9], 4
          %s422 = int_to_ptr.vmem [resolvable:$true] %s421
          %427 = dma.vmem_to_hbm [thread:$0]  %s422, 256, %s420, [#allocation6], 128, 128, 8
        $region56: #{tpu_custom_call.1} parent=31 // pred_fallthru
          _
        // Predicated region
        $region57: #{tpu_custom_call.1} parent=31 // pred_check
          %p428 = pneg %p138
        $region58: #{tpu_custom_call.1} parent=31 // pred_check_branch
          %430 = sbr.rel (%p428) target = $region60
        $region59: #{tpu_custom_call.1} parent=31 // pred_region
          %431 = dma.done [#allocation6], 256
        $region60: #{tpu_custom_call.1} parent=31 // pred_fallthru
          _
      $region32: #{tpu_custom_call.1} parent=5 // pred_fallthru
        _
      %p432 = scmp.le.s32.totalorder 2, %s14
      // Predicated region
      $region61: #{tpu_custom_call.1} parent=5 // pred_check
        %p433 = pneg %p432
      $region62: #{tpu_custom_call.1} parent=5 // pred_check_branch
        %435 = sbr.rel (%p433) target = $region64
      $region63: #{tpu_custom_call.1} parent=5 // pred_region
        %s436 = ssub.s32 %s14, 2
      $region64: #{tpu_custom_call.1} parent=5 // pred_fallthru
        _
    $region6: #{tpu_custom_call.1} parent=1 // loop_footer
      %s18 = sadd.s32 1, %s14
    $region7: #{tpu_custom_call.1} parent=1 // loop_footer_branch
      %13 = sbr.rel target = $region3
    $region8: #{tpu_custom_call.1} parent=1 // loop_exit
      _
    %437 = vsyncpa [#allocation5], 1
    %s438 = scalar_lea.sflag [#allocation5], 1
    %439 = vsyncpa %s438, 1
    %440 = vsyncpa [#allocation8], 1
    %s441 = scalar_lea.sflag [#allocation8], 1
    %442 = vsyncpa %s441, 1
    %443 = vsyncpa [#allocation6], 1
    %s444 = scalar_lea.sflag [#allocation6], 1
    %445 = vsyncpa %s444, 1

</llo_original>
